<compile_context>
chip_gen: v6e
topology: v6e:2x2x1
jax: 0.10.0
libtpu: 0.0.40
codegen_flags: <defaults>
</compile_context>

<pallas_src>
import functools

import jax
import jax.numpy as jnp
from jax.experimental import pallas as pl
from jax.experimental.pallas import tpu as pltpu


def _round_up(a, m):
    return (a + m - 1) // m * m


def _conv_prelu_kernel(x_ref, w_ref, b_ref, alpha_ref, o_ref, *, wp, nout):
    """Fused 3x3 conv (single MXU matmul) + bias + PReLU for one batch element.

    x_ref     : (1, Cin, Nin_pad)  zero-padded flattened input (row stride wp)
    w_ref     : (Cout, 9*Cin)      conv weight packed tap-major
    b_ref     : (Cout, 1)          conv bias
    alpha_ref : (1, 1) SMEM        PReLU slope (single shared parameter)
    o_ref     : (1, Cout, nout)    flat conv output (row stride wp, lane-dense)
    """
    x = x_ref[0]                                            # (Cin, Nin_pad) f32

    # im2col in VMEM: each 3x3 tap is a contiguous window of the flat axis.
    cols = []
    for dy in range(3):
        for dx in range(3):
            off = dy * wp + dx                              # static offset
            cols.append(x[:, off:off + nout])               # (Cin, nout)
    xim = jnp.concatenate(cols, axis=0)                     # (9*Cin, nout)

    # Single deep contraction on the MXU (no explicit transposes needed).
    acc = jnp.dot(w_ref[...], xim,
                  preferred_element_type=jnp.float32)       # (Cout, nout)
    acc = acc + b_ref[...]                                  # bias over lanes

    alpha = alpha_ref[0, 0]
    y = jnp.where(acc >= 0, acc, alpha * acc)               # PReLU
    o_ref[0] = y.astype(o_ref.dtype)


def pixel_shuffle_forward(x, params, upscale_factor):
    """Conv2d(3x3, s=1, p=1) -> PixelShuffle(r) -> PReLU (PyTorch module semantics)."""
    w, b, alpha = params
    B, Cin, H, W = x.shape
    Cout = w.shape[0]
    r = upscale_factor
    assert Cout % (r * r) == 0, "out_channels must be divisible by upscale_factor**2"

    # Padded row width: >= W+2 (3x3 halo) and chosen so the flat output width
    # H*wp is a multiple of 128 -> lane-dense output stores (no masked vst).
    wp = W + 2
    while (H * wp) % 128 != 0:
        wp += 1
    nout = H * wp

    # Zero-pad: 1 row top/bottom, 1 col left, wp-W-1 cols right, then flatten
    # spatial dims onto the lane axis.  The extra right/tail zero padding only
    # feeds output columns that are cropped below.
    x_pad = jnp.pad(x, ((0, 0), (0, 0), (1, 1), (1, wp - W - 1)))
    nin = (H + 2) * wp
    nin_pad = _round_up(max(nin, 2 * wp + 2 + nout), 128)
    x_flat = jnp.pad(x_pad.reshape(B, Cin, nin),
                     ((0, 0), (0, 0), (0, nin_pad - nin)))

    # Pack the (Cout, Cin, 3, 3) conv weight tap-major -> (Cout, 9*Cin) so the
    # 9 taps x Cin channels form one fused contraction axis (matches the
    # in-kernel concatenation order).
    w_packed = jnp.transpose(w, (0, 2, 3, 1)).reshape(Cout, 9 * Cin).astype(jnp.float32)
    b_col = b.reshape(Cout, 1).astype(jnp.float32)
    alpha_s = jnp.asarray(alpha, jnp.float32).reshape(1, 1)

    kernel = functools.partial(_conv_prelu_kernel, wp=wp, nout=nout)

    # TODO(synk): for large H*W, add a row-tile grid axis with halo handling
    # so only O(tile) of the image is resident in VMEM per step (v7x 64 MiB).
    out_flat = pl.pallas_call(
        kernel,
        out_shape=jax.ShapeDtypeStruct((B, Cout, nout), x.dtype),
        grid_spec=pltpu.PrefetchScalarGridSpec(
            num_scalar_prefetch=0,
            grid=(B,),
            in_specs=[
                pl.BlockSpec((1, Cin, nin_pad), lambda bi: (bi, 0, 0)),   # x
                pl.BlockSpec((Cout, 9 * Cin), lambda bi: (0, 0)),         # W (resident)
                pl.BlockSpec((Cout, 1), lambda bi: (0, 0)),               # bias
                pl.BlockSpec((1, 1), lambda bi: (0, 0),
                             memory_space=pltpu.MemorySpace.SMEM),        # PReLU alpha
            ],
            out_specs=pl.BlockSpec((1, Cout, nout), lambda bi: (bi, 0, 0)),
        ),
        compiler_params=pltpu.CompilerParams(
            dimension_semantics=("parallel",)),
    )(x_flat, w_packed, b_col, alpha_s)

    # Crop the padded columns -> conv output in NCHW.
    conv = out_flat.reshape(B, Cout, H, wp)[:, :, :, :W]

    # nn.PixelShuffle(r): pure permutation, applied as wrapper layout plumbing.
    # (PReLU uses a single shared alpha, so applying it before the shuffle in
    # the kernel is mathematically identical to the module's order.)
    C = Cout // (r * r)
    y = conv.reshape(B, C, r, r, H, W)
    y = jnp.transpose(y, (0, 1, 4, 2, 5, 3))
    return y.reshape(B, C, H * r, W * r)


def ref_forward(x, params, upscale_factor):
    """Pure-JAX reference mirroring the PyTorch module exactly, for verification."""
    w, b, alpha = params
    r = upscale_factor
    y = jax.lax.conv_general_dilated(
        x.astype(jnp.float32), w.astype(jnp.float32),
        window_strides=(1, 1), padding=((1, 1), (1, 1)),
        dimension_numbers=('NCHW', 'OIHW', 'NCHW'))
    y = y + b.reshape(1, -1, 1, 1)
    B, Cout, H, W = y.shape
    C = Cout // (r * r)
    y = y.reshape(B, C, r, r, H, W)
    y = jnp.transpose(y, (0, 1, 4, 2, 5, 3)).reshape(B, C, H * r, W * r)
    return jnp.where(y >= 0, y, alpha * y)   # PReLU after the shuffle, as in the module


def init_params(key, in_channels, out_channels):
    """Deterministic init matching nn.Conv2d defaults + nn.PReLU() (alpha=0.25)."""
    kw, kb = jax.random.split(key)
    k = 1.0 / jnp.sqrt(jnp.float32(in_channels * 9))
    w = jax.random.uniform(kw, (out_channels, in_channels, 3, 3), jnp.float32, -k, k)
    b = jax.random.uniform(kb, (out_channels,), jnp.float32, -k, k)
    alpha = jnp.float32(0.25)
    return (w, b, alpha)


if __name__ == "__main__":
    B, Cin, H, W = 2, 8, 16, 16
    r = 2
    Cout = 32                      # must be divisible by r*r; shuffled output has 8 channels

    key = jax.random.PRNGKey(0)
    kx, kp = jax.random.split(key)
    x = jax.random.normal(kx, (B, Cin, H, W), jnp.float32)
    params = init_params(kp, Cin, Cout)

    out = jax.block_until_ready(pixel_shuffle_forward(x, params, r))
    ref = jax.block_until_ready(ref_forward(x, params, r))

    assert out.shape == (B, Cout // (r * r), H * r, W * r)
    assert jnp.allclose(out, ref, atol=1e-4, rtol=1e-4), \
        f"max abs diff {jnp.max(jnp.abs(out - ref))}"
    print("KERNEL_OK")
</pallas_src>

<mosaic_0001>
module attributes {stable_mosaic.version = 11 : i64} {
  func.func @_conv_prelu_kernel(%arg0: i32, %arg1: memref<1x8x512xf32, #tpu.memory_space<vmem>>, %arg2: memref<32x72xf32, #tpu.memory_space<vmem>>, %arg3: memref<32x1xf32, #tpu.memory_space<vmem>>, %arg4: memref<1x1xf32, #tpu.memory_space<smem>>, %arg5: memref<1x32x384xf32, #tpu.memory_space<vmem>>) attributes {dimension_semantics = [#tpu.dimension_semantics<parallel>], iteration_bounds = array<i64: 2>, scalar_prefetch = 0 : i64, scratch_operands = 0 : i64, tpu.core_type = #tpu.core_type<tc>, window_params = [{transform_indices = @transform_0, window_bounds = array<i64: 1, 8, 512>}, {pipeline_mode = #tpu.pipeline_mode<synchronous>, transform_indices = @transform_1, window_bounds = array<i64: 32, 72>}, {pipeline_mode = #tpu.pipeline_mode<synchronous>, transform_indices = @transform_2, window_bounds = array<i64: 32, 1>}, {transform_indices = @transform_3, window_bounds = array<i64: 1, 1>}, {transform_indices = @transform_4, window_bounds = array<i64: 1, 32, 384>}]} {
    %c0 = arith.constant 0 : index
    %c0_0 = arith.constant 0 : index
    %c0_1 = arith.constant 0 : index
    %0 = vector.load %arg1[%c0, %c0_0, %c0_1] : memref<1x8x512xf32, #tpu.memory_space<vmem>>, vector<1x8x512xf32>
    %1 = vector.shape_cast %0 : vector<1x8x512xf32> to vector<8x512xf32>
    %2 = vector.extract_strided_slice %1 {offsets = [0, 0], sizes = [8, 384], strides = [1, 1]} : vector<8x512xf32> to vector<8x384xf32>
    %3 = vector.extract_strided_slice %1 {offsets = [0, 1], sizes = [8, 384], strides = [1, 1]} : vector<8x512xf32> to vector<8x384xf32>
    %4 = vector.extract_strided_slice %1 {offsets = [0, 2], sizes = [8, 384], strides = [1, 1]} : vector<8x512xf32> to vector<8x384xf32>
    %5 = vector.extract_strided_slice %1 {offsets = [0, 24], sizes = [8, 384], strides = [1, 1]} : vector<8x512xf32> to vector<8x384xf32>
    %6 = vector.extract_strided_slice %1 {offsets = [0, 25], sizes = [8, 384], strides = [1, 1]} : vector<8x512xf32> to vector<8x384xf32>
    %7 = vector.extract_strided_slice %1 {offsets = [0, 26], sizes = [8, 384], strides = [1, 1]} : vector<8x512xf32> to vector<8x384xf32>
    %8 = vector.extract_strided_slice %1 {offsets = [0, 48], sizes = [8, 384], strides = [1, 1]} : vector<8x512xf32> to vector<8x384xf32>
    %9 = vector.extract_strided_slice %1 {offsets = [0, 49], sizes = [8, 384], strides = [1, 1]} : vector<8x512xf32> to vector<8x384xf32>
    %10 = vector.extract_strided_slice %1 {offsets = [0, 50], sizes = [8, 384], strides = [1, 1]} : vector<8x512xf32> to vector<8x384xf32>
    %11 = tpu.concatenate %2, %3, %4, %5, %6, %7, %8, %9, %10 in 0 : vector<8x384xf32>, vector<8x384xf32>, vector<8x384xf32>, vector<8x384xf32>, vector<8x384xf32>, vector<8x384xf32>, vector<8x384xf32>, vector<8x384xf32>, vector<8x384xf32> -> vector<72x384xf32>
    %c0_2 = arith.constant 0 : index
    %c0_3 = arith.constant 0 : index
    %12 = vector.load %arg2[%c0_2, %c0_3] : memref<32x72xf32, #tpu.memory_space<vmem>>, vector<32x72xf32>
    %cst = arith.constant dense<0.000000e+00> : vector<32x384xf32>
    %13 = tpu.matmul %12, %11, %cst {dimension_numbers = #tpu.dot_dimension_numbers<[1], [0], [0], [1], [0, 0, 1, 1], [], []>} : vector<32x72xf32>, vector<72x384xf32>, vector<32x384xf32> -> vector<32x384xf32>
    %c0_4 = arith.constant 0 : index
    %c0_5 = arith.constant 0 : index
    %14 = vector.load %arg3[%c0_4, %c0_5] : memref<32x1xf32, #tpu.memory_space<vmem>>, vector<32x1xf32>
    %15 = vector.broadcast %14 : vector<32x1xf32> to vector<32x384xf32>
    %16 = arith.addf %13, %15 : vector<32x384xf32>
    %c0_6 = arith.constant 0 : index
    %c0_7 = arith.constant 0 : index
    %17 = memref.load %arg4[%c0_6, %c0_7] : memref<1x1xf32, #tpu.memory_space<smem>>
    %cst_8 = arith.constant 0.000000e+00 : f32
    %18 = vector.broadcast %cst_8 : f32 to vector<32x384xf32>
    %19 = arith.cmpf oge, %16, %18 : vector<32x384xf32>
    %20 = vector.broadcast %17 : f32 to vector<32x384xf32>
    %21 = arith.mulf %20, %16 : vector<32x384xf32>
    %22 = arith.select %19, %16, %21 : vector<32x384xi1>, vector<32x384xf32>
    %c0_9 = arith.constant 0 : index
    %c0_10 = arith.constant 0 : index
    %c0_11 = arith.constant 0 : index
    %23 = vector.load %arg5[%c0_9, %c0_10, %c0_11] : memref<1x32x384xf32, #tpu.memory_space<vmem>>, vector<1x32x384xf32>
    %24 = vector.shape_cast %23 : vector<1x32x384xf32> to vector<32x384xf32>
    %25 = vector.shape_cast %22 : vector<32x384xf32> to vector<1x32x384xf32>
    tpu.vector_store %arg5[%c0_9, %c0_10, %c0_11], %25 {strides = array<i32>} : memref<1x32x384xf32, #tpu.memory_space<vmem>>, vector<1x32x384xf32>,
    return
  }
  func.func @transform_0(%arg0: i32) -> (i32, i32, i32) {
    %c0_i32 = arith.constant 0 : i32
    %c0_i32_0 = arith.constant 0 : i32
    %c0_i32_1 = arith.constant 0 : i32
    return %arg0, %c0_i32, %c0_i32_0 : i32, i32, i32
  }
  func.func @transform_1(%arg0: i32) -> (i32, i32) {
    %c0_i32 = arith.constant 0 : i32
    %c0_i32_0 = arith.constant 0 : i32
    %c0_i32_1 = arith.constant 0 : i32
    return %c0_i32, %c0_i32_0 : i32, i32
  }
  func.func @transform_2(%arg0: i32) -> (i32, i32) {
    %c0_i32 = arith.constant 0 : i32
    %c0_i32_0 = arith.constant 0 : i32
    %c0_i32_1 = arith.constant 0 : i32
    return %c0_i32, %c0_i32_0 : i32, i32
  }
  func.func @transform_3(%arg0: i32) -> (i32, i32) {
    %c0_i32 = arith.constant 0 : i32
    %c0_i32_0 = arith.constant 0 : i32
    %c0_i32_1 = arith.constant 0 : i32
    return %c0_i32, %c0_i32_0 : i32, i32
  }
  func.func @transform_4(%arg0: i32) -> (i32, i32, i32) {
    %c0_i32 = arith.constant 0 : i32
    %c0_i32_0 = arith.constant 0 : i32
    %c0_i32_1 = arith.constant 0 : i32
    return %arg0, %c0_i32, %c0_i32_0 : i32, i32, i32
  }
}

</mosaic_0001>

<llo_original>
// kernel: tpu_custom_call.1
$region0: #{tpu_custom_call.1}
  #allocation0 [shape = 'u32[]', space=smem, size = 0x4, offset = 0x4, fixed_abs, tag = 'smem constant byte address 0x4 - core index']
  #allocation1 [shape = 'u32[144,128]{1,0:T(1,128)}', space=vmem, size = 0x12000, scoped, tag = 'internal scratch']
  #allocation2 [shape = 'f32[1,1]{1,0:T(1,128)S(6)}', space=smem, size = 0x200, scoped, tag = 'scoped memory for tpu_custom_call.1']
  %s0 = inlined_call_operand.hbm [shape: f32[2,8,512], index: 0, kind: input, shape index: {}]
  %s1 = inlined_call_operand.vmem [shape: f32[32,72], index: 1, kind: input, shape index: {}]
  %s2 = inlined_call_operand.vmem [shape: f32[32,1], index: 2, kind: input, shape index: {}]
  %s3 = inlined_call_operand.<no memory space> [shape: f32[1,1], index: 3, kind: input, shape index: {}]
  %s4 = inlined_call_operand.hbm [shape: f32[2,32,384], index: 4, kind: output, shape index: {}]
  %s5 = sld [smem:[#allocation0]]
  $region53: #{tpu_custom_call.1} parent=0
    _
  %s7 = ssub.s32 1, %s5
  %s8 = scalar_select 0, %s7, %s5
  %9 = sst [smem:[#allocation2]] %s3
  $region1: #{tpu_custom_call.1} parent=0
    #allocation3 [shape = 'u8[32768]{0}', space=vmem, size = 0x8000, scoped, tag = 'input window, operand 0']
    #allocation4 [shape = 's32[2]{0}', space=sflag, size = 0x8, scoped, tag = 'scoped memory for tpu_custom_call.1']
    #allocation5 [shape = 's32[2]{0}', space=sflag, size = 0x8, scoped, tag = 'scoped memory for tpu_custom_call.1']
    #allocation6 [shape = 'u8[98304]{0}', space=vmem, size = 0x18000, scoped, tag = 'output window, operand 0']
    %10 = vsyncpa [#allocation4], 0
    %s11 = scalar_lea.sflag [#allocation4], 1
    %12 = vsyncpa %s11, 0
    %13 = vsyncpa [#allocation5], 0
    %s14 = scalar_lea.sflag [#allocation5], 1
    %15 = vsyncpa %s14, 0
    loop: start=0, step=1, limit=4
    $region2: #{tpu_custom_call.1} parent=1 // loop_pre_header
      _
    $region3: #{tpu_custom_call.1} parent=1 // loop_header
      %s17 = sphi 0, %s21
      %p18 = scmp.ge.s32.totalorder %s17, 4
      %s27 = sphi 0, %s29
      %s30 = sphi 0, %s27
      %s31 = sphi 0, %s30
      %s47 = sphi 0, %s31
      %s51 = sphi 0, %s51
      %s53 = sphi 0, %s51
      %s54 = sphi 0, %s53
      %s68 = sphi 0, %s54
      %s72 = sphi 0, %s72
      %s74 = sphi 0, %s72
      %s75 = sphi 0, %s74
      %s89 = sphi 0, %s75
      %s93 = sphi 0, %s93
      %s95 = sphi 0, %s93
      %s96 = sphi 0, %s95
      %s110 = sphi 0, %s96
      %s116 = sphi 0, %s118
      %s119 = sphi 0, %s116
      %s120 = sphi 0, %s119
      %s136 = sphi 0, %s120
    $region4: #{tpu_custom_call.1} parent=1 // loop_header_branch
      %20 = sbr.rel (%p18) target = $region8
    $region5: #{tpu_custom_call.1} parent=1 // loop_body
      %s22 = ssub.s32 %s17, 1
      %s23 = ssub.s32 %s17, 2
      %s24 = sadd.s32 %s17, 1
      %s25 = ssub.s32 %s17, %s24
      %p26 = scmp.eq.s32.totalorder %s25, 0
      %s28 = sadd.s32 %s27, 1
      %s29 = scalar_select %p26, %s27, %s28
      %p32 = pneg %p26
      %p33 = scmp.eq.s32.totalorder %s17, 1
      %p34 = por %p32, %p33
      %p35 = scmp.ne.s32.totalorder %s27, %s30
      %p36 = scmp.eq.s32.totalorder %s17, 0
      %p37 = por %p35, %p36
      %p38 = scmp.ne.s32.totalorder %s27, %s30
      %p39 = scmp.eq.s32.totalorder %s22, 1
      %p40 = por %p38, %p39
      %p41 = scmp.ne.s32.totalorder %s30, %s31
      %p42 = scmp.eq.s32.totalorder %s22, 0
      %p43 = por %p41, %p42
      %p44 = scmp.ne.s32.totalorder %s30, %s31
      %p45 = scmp.eq.s32.totalorder %s23, 1
      %p46 = por %p44, %p45
      %p48 = scmp.ne.s32.totalorder %s31, %s47
      %p49 = scmp.eq.s32.totalorder %s23, 0
      %p50 = por %p48, %p49
      %s52 = sadd.s32 %s51, 1
      %p55 = scmp.eq.s32.totalorder %s17, 1
      %p56 = scmp.ne.s32.totalorder %s51, %s53
      %p57 = scmp.eq.s32.totalorder %s17, 0
      %p58 = por %p56, %p57
      %p59 = scmp.ne.s32.totalorder %s51, %s53
      %p60 = scmp.eq.s32.totalorder %s22, 1
      %p61 = por %p59, %p60
      %p62 = scmp.ne.s32.totalorder %s53, %s54
      %p63 = scmp.eq.s32.totalorder %s22, 0
      %p64 = por %p62, %p63
      %p65 = scmp.ne.s32.totalorder %s53, %s54
      %p66 = scmp.eq.s32.totalorder %s23, 1
      %p67 = por %p65, %p66
      %p69 = scmp.ne.s32.totalorder %s54, %s68
      %p70 = scmp.eq.s32.totalorder %s23, 0
      %p71 = por %p69, %p70
      %s73 = sadd.s32 %s72, 1
      %p76 = scmp.eq.s32.totalorder %s17, 1
      %p77 = scmp.ne.s32.totalorder %s72, %s74
      %p78 = scmp.eq.s32.totalorder %s17, 0
      %p79 = por %p77, %p78
      %p80 = scmp.ne.s32.totalorder %s72, %s74
      %p81 = scmp.eq.s32.totalorder %s22, 1
      %p82 = por %p80, %p81
      %p83 = scmp.ne.s32.totalorder %s74, %s75
      %p84 = scmp.eq.s32.totalorder %s22, 0
      %p85 = por %p83, %p84
      %p86 = scmp.ne.s32.totalorder %s74, %s75
      %p87 = scmp.eq.s32.totalorder %s23, 1
      %p88 = por %p86, %p87
      %p90 = scmp.ne.s32.totalorder %s75, %s89
      %p91 = scmp.eq.s32.totalorder %s23, 0
      %p92 = por %p90, %p91
      %s94 = sadd.s32 %s93, 1
      %p97 = scmp.eq.s32.totalorder %s17, 1
      %p98 = scmp.ne.s32.totalorder %s93, %s95
      %p99 = scmp.eq.s32.totalorder %s17, 0
      %p100 = por %p98, %p99
      %p101 = scmp.ne.s32.totalorder %s93, %s95
      %p102 = scmp.eq.s32.totalorder %s22, 1
      %p103 = por %p101, %p102
      %p104 = scmp.ne.s32.totalorder %s95, %s96
      %p105 = scmp.eq.s32.totalorder %s22, 0
      %p106 = por %p104, %p105
      %p107 = scmp.ne.s32.totalorder %s95, %s96
      %p108 = scmp.eq.s32.totalorder %s23, 1
      %p109 = por %p107, %p108
      %p111 = scmp.ne.s32.totalorder %s96, %s110
      %p112 = scmp.eq.s32.totalorder %s23, 0
      %p113 = por %p111, %p112
      %s114 = ssub.s32 %s17, %s24
      %p115 = scmp.eq.s32.totalorder %s114, 0
      %s117 = sadd.s32 %s116, 1
      %s118 = scalar_select %p115, %s116, %s117
      %p121 = pneg %p115
      %p122 = scmp.eq.s32.totalorder %s17, 1
      %p123 = por %p121, %p122
      %p124 = scmp.ne.s32.totalorder %s116, %s119
      %p125 = scmp.eq.s32.totalorder %s17, 0
      %p126 = por %p124, %p125
      %p127 = scmp.ne.s32.totalorder %s116, %s119
      %p128 = scmp.eq.s32.totalorder %s22, 1
      %p129 = por %p127, %p128
      %p130 = scmp.ne.s32.totalorder %s119, %s120
      %p131 = scmp.eq.s32.totalorder %s22, 0
      %p132 = por %p130, %p131
      %p133 = scmp.ne.s32.totalorder %s119, %s120
      %p134 = scmp.eq.s32.totalorder %s23, 1
      %p135 = por %p133, %p134
      %p137 = scmp.ne.s32.totalorder %s120, %s136
      %p138 = scmp.eq.s32.totalorder %s23, 0
      %p139 = por %p137, %p138
      %p140 = scmp.le.s32.totalorder 1, %s17
      %p141 = scmp.lt.s32.totalorder %s17, 3
      %p142 = pnand %p140, %p141
      %p143 = pneg %p142
      // Predicated region
      $region9: #{tpu_custom_call.1} parent=5 // pred_check
        _
      $region10: #{tpu_custom_call.1} parent=5 // pred_check_branch
        %145 = sbr.rel (%p142) target = $region12
      $region11: #{tpu_custom_call.1} parent=5 // pred_region
        %s146 = ssub.s32 %s17, 1
        // Predicated region
        $region13: #{tpu_custom_call.1} parent=11 // pred_check
          %p147 = pneg %p64
        $region14: #{tpu_custom_call.1} parent=11 // pred_check_branch
          %149 = sbr.rel (%p147) target = $region16
        $region15: #{tpu_custom_call.1} parent=11 // pred_region
          _
        $region16: #{tpu_custom_call.1} parent=11 // pred_fallthru
          _
        // Predicated region
        $region17: #{tpu_custom_call.1} parent=11 // pred_check
          %p150 = pneg %p85
        $region18: #{tpu_custom_call.1} parent=11 // pred_check_branch
          %152 = sbr.rel (%p150) target = $region20
        $region19: #{tpu_custom_call.1} parent=11 // pred_region
          _
        $region20: #{tpu_custom_call.1} parent=11 // pred_fallthru
          _
        // Predicated region
        $region21: #{tpu_custom_call.1} parent=11 // pred_check
          %p153 = pneg %p106
        $region22: #{tpu_custom_call.1} parent=11 // pred_check_branch
          %155 = sbr.rel (%p153) target = $region24
        $region23: #{tpu_custom_call.1} parent=11 // pred_region
          _
        $region24: #{tpu_custom_call.1} parent=11 // pred_fallthru
          _
      $region12: #{tpu_custom_call.1} parent=5 // pred_fallthru
        _
      %p156 = scmp.lt.s32.totalorder %s17, 2
      // Predicated region
      $region25: #{tpu_custom_call.1} parent=5 // pred_check
        %p157 = pneg %p156
      $region26: #{tpu_custom_call.1} parent=5 // pred_check_branch
        %159 = sbr.rel (%p157) target = $region28
      $region27: #{tpu_custom_call.1} parent=5 // pred_region
        // Predicated region
        $region29: #{tpu_custom_call.1} parent=27 // pred_check
          %p160 = pneg %p37
        $region30: #{tpu_custom_call.1} parent=27 // pred_check_branch
          %162 = sbr.rel (%p160) target = $region32
        $region31: #{tpu_custom_call.1} parent=27 // pred_region
          %s163 = sand.u32 %s27, 1
          %s164 = scalar_lea.sflag [#allocation4], %s163
          %s165 = sand.u32 %s27, 1
          %s166 = smul.addr %s165, 32
          %s167 = scalar_lea.vmem [#allocation3], %s166
          %s169 = ssub.s32 512, 512
          %170 = vsyncadd %s164, %s169
          %s171 = smul.addr %s17, 4
          %s172 = smul.addr %s171, 128
          %s173 = scalar_lea.hbm %s0, %s172
          %s175 = sshll.u32 %s167, 4
          %s176 = int_to_ptr.vmem [resolvable:$true] %s175
          %178 = dma.hbm_to_vmem [thread:$0]  %s173, 512, %s176, %s164
        $region32: #{tpu_custom_call.1} parent=27 // pred_fallthru
          _
      $region28: #{tpu_custom_call.1} parent=5 // pred_fallthru
        _
      %p179 = scmp.le.s32.totalorder 1, %s17
      %p180 = scmp.lt.s32.totalorder %s17, 3
      %p181 = pnand %p179, %p180
      %p182 = pneg %p181
      // Predicated region
      $region33: #{tpu_custom_call.1} parent=5 // pred_check
        _
      $region34: #{tpu_custom_call.1} parent=5 // pred_check_branch
        %184 = sbr.rel (%p181) target = $region36
      $region35: #{tpu_custom_call.1} parent=5 // pred_region
        %s185 = ssub.s32 %s17, 1
        %s186 = sand.u32 %s30, 1
        %s187 = scalar_lea.sflag [#allocation4], %s186
        %s188 = sand.u32 %s30, 1
        %s189 = smul.addr %s188, 32
        %s190 = scalar_lea.vmem [#allocation3], %s189
        // Predicated region
        $region37: #{tpu_custom_call.1} parent=35 // pred_check
          %p191 = pneg %p43
        $region38: #{tpu_custom_call.1} parent=35 // pred_check_branch
          %193 = sbr.rel (%p191) target = $region40
        $region39: #{tpu_custom_call.1} parent=35 // pred_region
          %194 = dma.done %s187, 512
        $region40: #{tpu_custom_call.1} parent=35 // pred_fallthru
          _
        %s195 = sand.u32 %s30, 1
        %s196 = scalar_lea.sflag [#allocation4], %s195
        %s197 = sand.u32 %s30, 1
        %s198 = smul.addr %s197, 32
        %s199 = scalar_lea.vmem [#allocation3], %s198
        %p200 = pneg %p43
        %p201 = pneg %p40
        %p202 = pneg %p64
        %p203 = pneg %p61
        %p204 = pneg %p85
        %p205 = pneg %p82
        %p206 = pneg %p106
        %p207 = pneg %p103
        %p208 = pneg %p132
        %p209 = pneg %p129
        %s210 = sand.u32 %s119, 1
        %s211 = scalar_lea.sflag [#allocation5], %s210
        %s212 = sand.u32 %s119, 1
        %s213 = smul.addr %s212, 96
        %s214 = scalar_lea.vmem [#allocation6], %s213
        %v215 = vld [vmem:[%s190] sm:$0xff]
        %v216 = vld [vmem:[%s190 + $0x8] sm:$0xff]
        %v217 = vld [vmem:[%s190 + $0x10] sm:$0xff]
        %v218 = vld [vmem:[%s190 + $0x18] sm:$0xff]
        %223 = vrot.lane.b32.xlu0 %v215, 127
        %v224 = vpop.permute.xlu0 %223
        %225 = vrot.lane.b32.xlu0 %v216, 127
        %v226 = vpop.permute.xlu0 %225
        %227 = vrot.lane.b32.xlu0 %v217, 127
        %v228 = vpop.permute.xlu0 %227
        %229 = vrot.lane.b32.xlu0 %v218, 127
        %v230 = vpop.permute.xlu0 %229
        %vm231 = vcmask 1039360
        %v232 = vsel %vm231, %v224, %v226
        %v233 = vsel %vm231, %v226, %v228
        %v234 = vsel %vm231, %v228, %v230
        %238 = vrot.lane.b32.xlu0 %v215, 126
        %v239 = vpop.permute.xlu0 %238
        %240 = vrot.lane.b32.xlu0 %v216, 126
        %v241 = vpop.permute.xlu0 %240
        %242 = vrot.lane.b32.xlu0 %v217, 126
        %v243 = vpop.permute.xlu0 %242
        %244 = vrot.lane.b32.xlu0 %v218, 126
        %v245 = vpop.permute.xlu0 %244
        %vm246 = vcmask 1031168
        %v247 = vsel %vm246, %v239, %v241
        %v248 = vsel %vm246, %v241, %v243
        %v249 = vsel %vm246, %v243, %v245
        %253 = vrot.lane.b32.xlu0 %v215, 104
        %v254 = vpop.permute.xlu0 %253
        %255 = vrot.lane.b32.xlu0 %v216, 104
        %v256 = vpop.permute.xlu0 %255
        %257 = vrot.lane.b32.xlu0 %v217, 104
        %v258 = vpop.permute.xlu0 %257
        %259 = vrot.lane.b32.xlu0 %v218, 104
        %v260 = vpop.permute.xlu0 %259
        %vm261 = vcmask 850944
        %v262 = vsel %vm261, %v254, %v256
        %v263 = vsel %vm261, %v256, %v258
        %v264 = vsel %vm261, %v258, %v260
        %268 = vrot.lane.b32.xlu0 %v215, 103
        %v269 = vpop.permute.xlu0 %268
        %270 = vrot.lane.b32.xlu0 %v216, 103
        %v271 = vpop.permute.xlu0 %270
        %272 = vrot.lane.b32.xlu0 %v217, 103
        %v273 = vpop.permute.xlu0 %272
        %274 = vrot.lane.b32.xlu0 %v218, 103
        %v275 = vpop.permute.xlu0 %274
        %vm276 = vcmask 842752
        %v277 = vsel %vm276, %v269, %v271
        %v278 = vsel %vm276, %v271, %v273
        %v279 = vsel %vm276, %v273, %v275
        %283 = vrot.lane.b32.xlu0 %v215, 102
        %v284 = vpop.permute.xlu0 %283
        %285 = vrot.lane.b32.xlu0 %v216, 102
        %v286 = vpop.permute.xlu0 %285
        %287 = vrot.lane.b32.xlu0 %v217, 102
        %v288 = vpop.permute.xlu0 %287
        %289 = vrot.lane.b32.xlu0 %v218, 102
        %v290 = vpop.permute.xlu0 %289
        %vm291 = vcmask 834560
        %v292 = vsel %vm291, %v284, %v286
        %v293 = vsel %vm291, %v286, %v288
        %v294 = vsel %vm291, %v288, %v290
        %298 = vrot.lane.b32.xlu0 %v215, 80
        %v299 = vpop.permute.xlu0 %298
        %300 = vrot.lane.b32.xlu0 %v216, 80
        %v301 = vpop.permute.xlu0 %300
        %302 = vrot.lane.b32.xlu0 %v217, 80
        %v303 = vpop.permute.xlu0 %302
        %304 = vrot.lane.b32.xlu0 %v218, 80
        %v305 = vpop.permute.xlu0 %304
        %vm306 = vcmask 654336
        %v307 = vsel %vm306, %v299, %v301
        %v308 = vsel %vm306, %v301, %v303
        %v309 = vsel %vm306, %v303, %v305
        %313 = vrot.lane.b32.xlu0 %v215, 79
        %v314 = vpop.permute.xlu0 %313
        %315 = vrot.lane.b32.xlu0 %v216, 79
        %v316 = vpop.permute.xlu0 %315
        %317 = vrot.lane.b32.xlu0 %v217, 79
        %v318 = vpop.permute.xlu0 %317
        %319 = vrot.lane.b32.xlu0 %v218, 79
        %v320 = vpop.permute.xlu0 %319
        %vm321 = vcmask 646144
        %v322 = vsel %vm321, %v314, %v316
        %v323 = vsel %vm321, %v316, %v318
        %v324 = vsel %vm321, %v318, %v320
        %328 = vrot.lane.b32.xlu0 %v215, 78
        %v329 = vpop.permute.xlu0 %328
        %330 = vrot.lane.b32.xlu0 %v216, 78
        %v331 = vpop.permute.xlu0 %330
        %332 = vrot.lane.b32.xlu0 %v217, 78
        %v333 = vpop.permute.xlu0 %332
        %334 = vrot.lane.b32.xlu0 %v218, 78
        %v335 = vpop.permute.xlu0 %334
        %vm336 = vcmask 637952
        %v337 = vsel %vm336, %v329, %v331
        %v338 = vsel %vm336, %v331, %v333
        %v339 = vsel %vm336, %v333, %v335
        %v343 = vld [vmem:[%s1] sm:$0xff]
        %v344 = vld [vmem:[%s1 + $0x8] sm:$0xff]
        %v345 = vld [vmem:[%s1 + $0x10] sm:$0xff]
        %v346 = vld [vmem:[%s1 + $0x18] sm:$0xff]
        %v347 = vld [vmem:[%s2] sm:$0xff]
        %v348 = vld [vmem:[%s2 + $0x8] sm:$0xff]
        %v349 = vld [vmem:[%s2 + $0x10] sm:$0xff]
        %v350 = vld [vmem:[%s2 + $0x18] sm:$0xff]
        %352 = vset.pattern.permute.xlu0 0
        %353 = vperm.xlu0 %352, %v347
        %v354 = vpop.permute.xlu0 %353
        %357 = vset.pattern.permute.xlu0 0
        %358 = vperm.xlu0 %357, %v348
        %v359 = vpop.permute.xlu0 %358
        %362 = vset.pattern.permute.xlu0 0
        %363 = vperm.xlu0 %362, %v349
        %v364 = vpop.permute.xlu0 %363
        %367 = vset.pattern.permute.xlu0 0
        %368 = vperm.xlu0 %367, %v350
        %v369 = vpop.permute.xlu0 %368
        %vm371 = vcmask 588800
        %v373 = vsel %vm371, %v343, 0
        %v376 = vsel %vm371, %v344, 0
        %v379 = vsel %vm371, %v345, 0
        %v382 = vsel %vm371, %v346, 0
        %384 = vmatprep.subr.mxu0 0.0
        %385 = vmatpush1.msra.mxu0 0.0
        %386 = vmatprep.subr.mxu0 0.0
        %387 = vmatpush1.msra.mxu0 0.0
        %388 = vmatprep.subr.mxu0 0.0
        %389 = vmatpush1.msra.mxu0 0.0
        %390 = vmatprep.subr.mxu0 0.0
        %391 = vmatpush1.msra.mxu0 0.0
        %392 = vmatprep.subr.mxu0 0.0
        %393 = vmatpush1.msra.mxu0 0.0
        %394 = vmatprep.subr.mxu0 0.0
        %395 = vmatpush1.msra.mxu0 0.0
        %396 = vmatprep.subr.mxu0 0.0
        %397 = vmatpush1.msra.mxu0 0.0
        %398 = vmatprep.subr.mxu0 %v338
        %399 = vmatpush1.msra.mxu0 %v337
        %400 = vmatprep.subr.mxu0 %v323
        %401 = vmatpush1.msra.mxu0 %v322
        %402 = vmatprep.subr.mxu0 %v308
        %403 = vmatpush1.msra.mxu0 %v307
        %404 = vmatprep.subr.mxu0 %v293
        %405 = vmatpush1.msra.mxu0 %v292
        %406 = vmatprep.subr.mxu0 %v278
        %407 = vmatpush1.msra.mxu0 %v277
        %408 = vmatprep.subr.mxu0 %v263
        %409 = vmatpush1.msra.mxu0 %v262
        %410 = vmatprep.subr.mxu0 %v248
        %411 = vmatpush1.msra.mxu0 %v247
        %412 = vmatprep.subr.mxu0 %v233
        %413 = vmatpush1.msra.mxu0 %v232
        %414 = vmatprep.subr.mxu0 %v216
        %415 = vmatpush1.msra.mxu0 %v215
        %416 = vmatprep.subr.mxu0 0.0
        %417 = vmatpush2.msra.mxu0 0.0
        %418 = vmatprep.subr.mxu0 0.0
        %419 = vmatpush2.msra.mxu0 0.0
        %420 = vmatprep.subr.mxu0 0.0
        %421 = vmatpush2.msra.mxu0 0.0
        %422 = vmatprep.subr.mxu0 0.0
        %423 = vmatpush2.msra.mxu0 0.0
        %424 = vmatprep.subr.mxu0 0.0
        %425 = vmatpush2.msra.mxu0 0.0
        %426 = vmatprep.subr.mxu0 0.0
        %427 = vmatpush2.msra.mxu0 0.0
        %428 = vmatprep.subr.mxu0 0.0
        %429 = vmatpush2.msra.mxu0 0.0
        %430 = vmatprep.subr.mxu0 0.0
        %431 = vmatpush2.msra.mxu0 0.0
        %432 = vmatprep.subr.mxu0 0.0
        %433 = vmatpush2.msra.mxu0 0.0
        %434 = vmatprep.subr.mxu0 0.0
        %435 = vmatpush2.msra.mxu0 0.0
        %436 = vmatprep.subr.mxu0 0.0
        %437 = vmatpush2.msra.mxu0 0.0
        %438 = vmatprep.subr.mxu0 0.0
        %439 = vmatpush2.msra.mxu0 0.0
        %440 = vmatprep.subr.mxu0 0.0
        %441 = vmatpush2.msra.mxu0 0.0
        %442 = vmatprep.subr.mxu0 0.0
        %443 = vmatpush2.msra.mxu0 0.0
        %444 = vmatprep.subr.mxu0 0.0
        %445 = vmatpush2.msra.mxu0 0.0
        %446 = vmatprep.subr.mxu0 0.0
        %447 = vmatpush2.msra.mxu0 0.0
        %448 = vmatprep.mubr.f32.mxu0 0.0
        %449 = vmatmul.mubr.f32.gmra.mxu0 %v373
        %v450 = vpop.f32.mrf.mxu0
        %v451 = vadd.f32 %v354, %v450
        %v452 = vpop.f32.mrf.mxu0
        %v453 = vadd.f32 %v354, %v452
        %454 = vmatprep.mubr.f32.mxu0 0.0
        %455 = vmatmul.mubr.f32.gmra.mxu0 %v376
        %v456 = vpop.f32.mrf.mxu0
        %v457 = vadd.f32 %v359, %v456
        %v458 = vpop.f32.mrf.mxu0
        %v459 = vadd.f32 %v359, %v458
        %460 = vmatprep.mubr.f32.mxu0 0.0
        %461 = vmatmul.mubr.f32.gmra.mxu0 %v379
        %v462 = vpop.f32.mrf.mxu0
        %v463 = vadd.f32 %v364, %v462
        %v464 = vpop.f32.mrf.mxu0
        %v465 = vadd.f32 %v364, %v464
        %466 = vmatprep.mubr.f32.mxu0 0.0
        %467 = vmatmul.mubr.f32.gmra.mxu0 %v382
        %v468 = vpop.f32.mrf.mxu0
        %v469 = vadd.f32 %v369, %v468
        %v470 = vpop.f32.mrf.mxu0
        %v471 = vadd.f32 %v369, %v470
        %472 = vdwg.mxu0
        %473 = vmatprep.subr.mxu0 0.0
        %474 = vmatpush1.msra.mxu0 0.0
        %475 = vmatprep.subr.mxu0 0.0
        %476 = vmatpush1.msra.mxu0 0.0
        %477 = vmatprep.subr.mxu0 0.0
        %478 = vmatpush1.msra.mxu0 0.0
        %479 = vmatprep.subr.mxu0 0.0
        %480 = vmatpush1.msra.mxu0 0.0
        %481 = vmatprep.subr.mxu0 0.0
        %482 = vmatpush1.msra.mxu0 0.0
        %483 = vmatprep.subr.mxu0 0.0
        %484 = vmatpush1.msra.mxu0 0.0
        %485 = vmatprep.subr.mxu0 0.0
        %486 = vmatpush1.msra.mxu0 0.0
        %487 = vmatprep.subr.mxu0 0.0
        %488 = vmatpush1.msra.mxu0 %v339
        %489 = vmatprep.subr.mxu0 0.0
        %490 = vmatpush1.msra.mxu0 %v324
        %491 = vmatprep.subr.mxu0 0.0
        %492 = vmatpush1.msra.mxu0 %v309
        %493 = vmatprep.subr.mxu0 0.0
        %494 = vmatpush1.msra.mxu0 %v294
        %495 = vmatprep.subr.mxu0 0.0
        %496 = vmatpush1.msra.mxu0 %v279
        %497 = vmatprep.subr.mxu0 0.0
        %498 = vmatpush1.msra.mxu0 %v264
        %499 = vmatprep.subr.mxu0 0.0
        %500 = vmatpush1.msra.mxu0 %v249
        %501 = vmatprep.subr.mxu0 0.0
        %502 = vmatpush1.msra.mxu0 %v234
        %503 = vmatprep.subr.mxu0 0.0
        %504 = vmatpush1.msra.mxu0 %v217
        %505 = vmatprep.subr.mxu0 0.0
        %506 = vmatpush2.msra.mxu0 0.0
        %507 = vmatprep.subr.mxu0 0.0
        %508 = vmatpush2.msra.mxu0 0.0
        %509 = vmatprep.subr.mxu0 0.0
        %510 = vmatpush2.msra.mxu0 0.0
        %511 = vmatprep.subr.mxu0 0.0
        %512 = vmatpush2.msra.mxu0 0.0
        %513 = vmatprep.subr.mxu0 0.0
        %514 = vmatpush2.msra.mxu0 0.0
        %515 = vmatprep.subr.mxu0 0.0
        %516 = vmatpush2.msra.mxu0 0.0
        %517 = vmatprep.subr.mxu0 0.0
        %518 = vmatpush2.msra.mxu0 0.0
        %519 = vmatprep.subr.mxu0 0.0
        %520 = vmatpush2.msra.mxu0 0.0
        %521 = vmatprep.subr.mxu0 0.0
        %522 = vmatpush2.msra.mxu0 0.0
        %523 = vmatprep.subr.mxu0 0.0
        %524 = vmatpush2.msra.mxu0 0.0
        %525 = vmatprep.subr.mxu0 0.0
        %526 = vmatpush2.msra.mxu0 0.0
        %527 = vmatprep.subr.mxu0 0.0
        %528 = vmatpush2.msra.mxu0 0.0
        %529 = vmatprep.subr.mxu0 0.0
        %530 = vmatpush2.msra.mxu0 0.0
        %531 = vmatprep.subr.mxu0 0.0
        %532 = vmatpush2.msra.mxu0 0.0
        %533 = vmatprep.subr.mxu0 0.0
        %534 = vmatpush2.msra.mxu0 0.0
        %535 = vmatprep.subr.mxu0 0.0
        %536 = vmatpush2.msra.mxu0 0.0
        %537 = vmatprep.mubr.f32.mxu0 0.0
        %538 = vmatmul.mubr.f32.gmra.mxu0 %v373
        %v539 = vpop.f32.mrf.mxu0
        %v540 = vadd.f32 %v354, %v539
        %v541 = vpop.f32.mrf.mxu0
        %542 = vmatprep.mubr.f32.mxu0 0.0
        %543 = vmatmul.mubr.f32.gmra.mxu0 %v376
        %v544 = vpop.f32.mrf.mxu0
        %v545 = vadd.f32 %v359, %v544
        %v546 = vpop.f32.mrf.mxu0
        %547 = vmatprep.mubr.f32.mxu0 0.0
        %548 = vmatmul.mubr.f32.gmra.mxu0 %v379
        %v549 = vpop.f32.mrf.mxu0
        %v550 = vadd.f32 %v364, %v549
        %v551 = vpop.f32.mrf.mxu0
        %552 = vmatprep.mubr.f32.mxu0 0.0
        %553 = vmatmul.mubr.f32.gmra.mxu0 %v382
        %v554 = vpop.f32.mrf.mxu0
        %v555 = vadd.f32 %v369, %v554
        %v556 = vpop.f32.mrf.mxu0
        %557 = vdwg.mxu0
        %s558 = sld [smem:[#allocation2]]
        %vm559 = vcmp.ge.f32.partialorder %v451, 0.0
        %vm560 = vcmp.ge.f32.partialorder %v453, 0.0
        %vm561 = vcmp.ge.f32.partialorder %v540, 0.0
        %vm562 = vcmp.ge.f32.partialorder %v457, 0.0
        %vm563 = vcmp.ge.f32.partialorder %v459, 0.0
        %vm564 = vcmp.ge.f32.partialorder %v545, 0.0
        %vm565 = vcmp.ge.f32.partialorder %v463, 0.0
        %vm566 = vcmp.ge.f32.partialorder %v465, 0.0
        %vm567 = vcmp.ge.f32.partialorder %v550, 0.0
        %vm568 = vcmp.ge.f32.partialorder %v469, 0.0
        %vm569 = vcmp.ge.f32.partialorder %v471, 0.0
        %vm570 = vcmp.ge.f32.partialorder %v555, 0.0
        %v571 = vstv %s558
        %v572 = vmul.f32 %v571, %v451
        %v573 = vmul.f32 %v571, %v453
        %v574 = vmul.f32 %v571, %v540
        %v575 = vmul.f32 %v571, %v457
        %v576 = vmul.f32 %v571, %v459
        %v577 = vmul.f32 %v571, %v545
        %v578 = vmul.f32 %v571, %v463
        %v579 = vmul.f32 %v571, %v465
        %v580 = vmul.f32 %v571, %v550
        %v581 = vmul.f32 %v571, %v469
        %v582 = vmul.f32 %v571, %v471
        %v583 = vmul.f32 %v571, %v555
        %v584 = vsel %vm559, %v451, %v572
        %v585 = vsel %vm560, %v453, %v573
        %v586 = vsel %vm561, %v540, %v574
        %v587 = vsel %vm562, %v457, %v575
        %v588 = vsel %vm563, %v459, %v576
        %v589 = vsel %vm564, %v545, %v577
        %v590 = vsel %vm565, %v463, %v578
        %v591 = vsel %vm566, %v465, %v579
        %v592 = vsel %vm567, %v550, %v580
        %v593 = vsel %vm568, %v469, %v581
        %v594 = vsel %vm569, %v471, %v582
        %v595 = vsel %vm570, %v555, %v583
        %596 = vst [vmem:[%s214] sm:$0xff] %v584
        %597 = vst [vmem:[%s214 + $0x8] sm:$0xff] %v585
        %598 = vst [vmem:[%s214 + $0x10] sm:$0xff] %v586
        %599 = vst [vmem:[%s214 + $0x18] sm:$0xff] %v587
        %600 = vst [vmem:[%s214 + $0x20] sm:$0xff] %v588
        %601 = vst [vmem:[%s214 + $0x28] sm:$0xff] %v589
        %602 = vst [vmem:[%s214 + $0x30] sm:$0xff] %v590
        %603 = vst [vmem:[%s214 + $0x38] sm:$0xff] %v591
        %604 = vst [vmem:[%s214 + $0x40] sm:$0xff] %v592
        %605 = vst [vmem:[%s214 + $0x48] sm:$0xff] %v593
        %606 = vst [vmem:[%s214 + $0x50] sm:$0xff] %v594
        %607 = vst [vmem:[%s214 + $0x58] sm:$0xff] %v595
        %s608 = sand.u32 %s119, 1
        %s609 = scalar_lea.sflag [#allocation5], %s608
        %s610 = sand.u32 %s119, 1
        %s611 = smul.addr %s610, 96
        %s612 = scalar_lea.vmem [#allocation6], %s611
        // Predicated region
        $region41: #{tpu_custom_call.1} parent=35 // pred_check
          %p613 = pneg %p129
        $region42: #{tpu_custom_call.1} parent=35 // pred_check_branch
          %615 = sbr.rel (%p613) target = $region44
        $region43: #{tpu_custom_call.1} parent=35 // pred_region
          %s617 = ssub.s32 1536, 1536
          %618 = vsyncadd %s609, %s617
          %s619 = smul.addr %s22, 12
          %s620 = smul.addr %s619, 128
          %s621 = scalar_lea.hbm %s4, %s620
          %s622 = sshll.u32 %s612, 4
          %s623 = int_to_ptr.vmem [resolvable:$true] %s622
          %628 = dma.vmem_to_hbm [thread:$0]  %s623, 1536, %s621, %s609, 384, 384, 24
        $region44: #{tpu_custom_call.1} parent=35 // pred_fallthru
          _
      $region36: #{tpu_custom_call.1} parent=5 // pred_fallthru
        _
      %p629 = scmp.le.s32.totalorder 2, %s17
      // Predicated region
      $region45: #{tpu_custom_call.1} parent=5 // pred_check
        %p630 = pneg %p629
      $region46: #{tpu_custom_call.1} parent=5 // pred_check_branch
        %632 = sbr.rel (%p630) target = $region48
      $region47: #{tpu_custom_call.1} parent=5 // pred_region
        %s633 = ssub.s32 %s17, 2
        // Predicated region
        $region49: #{tpu_custom_call.1} parent=47 // pred_check
          %p634 = pneg %p135
        $region50: #{tpu_custom_call.1} parent=47 // pred_check_branch
          %636 = sbr.rel (%p634) target = $region52
        $region51: #{tpu_custom_call.1} parent=47 // pred_region
          %s637 = sand.u32 %s120, 1
          %s638 = scalar_lea.sflag [#allocation5], %s637
          %s639 = sand.u32 %s120, 1
          %s640 = smul.addr %s639, 96
          %s641 = scalar_lea.vmem [#allocation6], %s640
          %642 = dma.done %s638, 1536
        $region52: #{tpu_custom_call.1} parent=47 // pred_fallthru
          _
      $region48: #{tpu_custom_call.1} parent=5 // pred_fallthru
        _
    $region6: #{tpu_custom_call.1} parent=1 // loop_footer
      %s21 = sadd.s32 1, %s17
    $region7: #{tpu_custom_call.1} parent=1 // loop_footer_branch
      %16 = sbr.rel target = $region3
    $region8: #{tpu_custom_call.1} parent=1 // loop_exit
      _
    %643 = vsyncpa [#allocation4], 1
    %s644 = scalar_lea.sflag [#allocation4], 1
    %645 = vsyncpa %s644, 1
    %646 = vsyncpa [#allocation5], 1
    %s647 = scalar_lea.sflag [#allocation5], 1
    %648 = vsyncpa %s647, 1

</llo_original>
